<compile_context>
chip_gen: v5e
topology: v5e:2x2
jax: 0.10.0
libtpu: 0.0.40
codegen_flags: <defaults>
</compile_context>

<pallas_src>
import functools

import jax
import jax.numpy as jnp
from jax.experimental import pallas as pl
from jax.experimental.pallas import tpu as pltpu

H1 = 256
H2 = 128
SUBLANE = 8      # f32 sublane multiple for the batch (M) dimension
DEF_TB = 1024    # default batch tile (rows per grid step)


def _cdiv(a, b):
    return -(-a // b)


def _round_up(n, m):
    return ((n + m - 1) // m) * m


def _pick_batch_tile(B, block_b):
    """Pick a sublane-aligned batch tile that minimizes padding; keep >=2 grid steps
    for large batches so both v7x TensorCores get work."""
    n_steps = _cdiv(B, block_b)
    if n_steps == 1 and B > 512:
        n_steps = 2
    tb = _round_up(_cdiv(B, n_steps), SUBLANE)
    b_p = tb * _cdiv(B, tb)
    return tb, b_p


def critic_kernel(x_ref, w1_ref, b1_ref, w2_ref, b2_ref, w3_ref, b3_ref, o_ref):
    # Layer 1: Linear + ReLU (f32 MXU matmul; K = state+action is tiny, cost negligible)
    h1 = jnp.dot(x_ref[...], w1_ref[...], preferred_element_type=jnp.float32)
    h1 = jnp.maximum(h1 + b1_ref[...], 0.0)
    # Layer 2: Linear + ReLU
    h2 = jnp.dot(h1, w2_ref[...], preferred_element_type=jnp.float32)
    h2 = jnp.maximum(h2 + b2_ref[...], 0.0)
    # Value head [H2] -> 1: VPU multiply + XLU lane reduction against the real [1, H2]
    # w3 row (an MXU matmul with N=1 would waste 127/128 of its columns).
    v = jnp.sum(h2 * w3_ref[...], axis=-1, keepdims=True) + b3_ref[...]
    o_ref[...] = v.astype(o_ref.dtype)


@functools.partial(jax.jit, static_argnames=("block_b",))
def _critic_mlp(x, w1, b1, w2, b2, w3_row, b3, block_b=DEF_TB):
    """x: [B, in_features] f32 -> value [B, 1] f32."""
    B, in_f = x.shape
    tb, b_p = _pick_batch_tile(B, block_b)
    if b_p != B:
        x = jnp.pad(x, ((0, b_p - B), (0, 0)))

    # Accurate cost hint (no padded dims) so XLA schedules surrounding ops sensibly.
    flops = 2 * b_p * (in_f * H1 + H1 * H2 + H2 * 1)
    bytes_accessed = (
        b_p * in_f * 4
        + (w1.size + b1.size + w2.size + b2.size + w3_row.size + b3.size) * 4
        + b_p * 4
    )
    cost = pl.CostEstimate(flops=flops, transcendentals=0,
                           bytes_accessed=bytes_accessed)

    resident = lambda i: (0, 0)  # weights / biases: same block every step -> VMEM-resident
    out = pl.pallas_call(
        critic_kernel,
        out_shape=jax.ShapeDtypeStruct((b_p, 1), jnp.float32),
        grid=(b_p // tb,),
        in_specs=[
            pl.BlockSpec((tb, in_f), lambda i: (i, 0)),   # x: streamed per batch tile
            pl.BlockSpec((in_f, H1), resident),
            pl.BlockSpec((1, H1), resident),
            pl.BlockSpec((H1, H2), resident),
            pl.BlockSpec((1, H2), resident),
            pl.BlockSpec((1, H2), resident),              # w3 as a [1, H2] row
            pl.BlockSpec((1, 1), resident),
        ],
        out_specs=pl.BlockSpec((tb, 1), lambda i: (i, 0)),
        compiler_params=pltpu.CompilerParams(dimension_semantics=("parallel",)),
        cost_estimate=cost,
    )(x, w1, b1, w2, b2, w3_row, b3)

    return out[:B]


def critic_forward(state, action, params, dim=1):
    """Mimics Critic.forward: concat(state, action) along `dim`, MLP -> value."""
    state = jnp.asarray(state, jnp.float32)
    action = jnp.asarray(action, jnp.float32)
    w1, b1, w2, b2, w3_row, b3 = params
    if dim == 0:
        # Single unbatched sample: concat feature vectors, add a batch dim.
        action = jnp.atleast_1d(action)
        inputs = jnp.concatenate((state, action), axis=0)[None, :]
        return _critic_mlp(inputs, w1, b1, w2, b2, w3_row, b3)[0]
    inputs = jnp.concatenate((state, action), axis=dim)
    return _critic_mlp(inputs, w1, b1, w2, b2, w3_row, b3)


def init_critic_params(key, state_size, action_size):
    """Deterministic init mimicking nn.Linear default (U[-1/sqrt(fan_in), +]).

    Parameters are stored directly in their kernel layouts (f32, weights as
    [in, out], w3 pre-transposed to a [1, H2] row) so the forward pass does no
    per-call pad/cast work.
    """
    in_size = state_size + action_size
    ks = jax.random.split(key, 6)

    def linear(kw, kb, fan_in, fan_out):
        bound = 1.0 / jnp.sqrt(jnp.float32(fan_in))
        w = jax.random.uniform(kw, (fan_in, fan_out), jnp.float32, -bound, bound)
        b = jax.random.uniform(kb, (1, fan_out), jnp.float32, -bound, bound)
        return w, b

    w1, b1 = linear(ks[0], ks[1], in_size, H1)
    w2, b2 = linear(ks[2], ks[3], H1, H2)
    w3, b3 = linear(ks[4], ks[5], H2, 1)
    w3_row = w3.T                    # [1, H2] row for the in-kernel lane reduction
    return (w1, b1, w2, b2, w3_row, b3)


def critic_reference(state, action, params):
    w1, b1, w2, b2, w3_row, b3 = params
    x = jnp.concatenate((state, action), axis=1)
    h1 = jnp.maximum(x @ w1 + b1, 0.0)
    h2 = jnp.maximum(h1 @ w2 + b2, 0.0)
    return h2 @ w3_row.T + b3


# TODO(synk): optimizer (Adam), replay memory (deque), save_trans/sample_batch are
# host-side training bookkeeping with no Pallas equivalent; only forward() is implemented.
# TODO(synk): if the surrounding TD3 code uses twin critics (Q1/Q2), both heads could be
# fused into this one pallas_call to halve the fixed launch/weight-DMA overhead.

if __name__ == "__main__":
    key = jax.random.PRNGKey(0)
    k_params, k_state, k_action = jax.random.split(key, 3)

    batch = 2
    state_size = 16
    action_size = 4

    params = init_critic_params(k_params, state_size, action_size)
    state = jax.random.normal(k_state, (batch, state_size), dtype=jnp.float32)
    action = jax.random.normal(k_action, (batch, action_size), dtype=jnp.float32)

    value = critic_forward(state, action, params, dim=1)
    value = jax.block_until_ready(value)

    ref = critic_reference(state, action, params)
    assert value.shape == (batch, 1)
    assert jnp.allclose(value, ref, atol=1e-2, rtol=1e-2), (value, ref)

    print("KERNEL_OK")
</pallas_src>

<mosaic_0001>
module attributes {stable_mosaic.version = 11 : i64} {
  func.func @critic_kernel(%arg0: i32, %arg1: memref<8x20xf32, #tpu.memory_space<vmem>>, %arg2: memref<20x256xf32, #tpu.memory_space<vmem>>, %arg3: memref<1x256xf32, #tpu.memory_space<vmem>>, %arg4: memref<256x128xf32, #tpu.memory_space<vmem>>, %arg5: memref<1x128xf32, #tpu.memory_space<vmem>>, %arg6: memref<1x128xf32, #tpu.memory_space<vmem>>, %arg7: memref<1x1xf32, #tpu.memory_space<vmem>>, %arg8: memref<8x1xf32, #tpu.memory_space<vmem>>) attributes {dimension_semantics = [#tpu.dimension_semantics<parallel>], iteration_bounds = array<i64: 1>, scalar_prefetch = 0 : i64, scratch_operands = 0 : i64, tpu.core_type = #tpu.core_type<tc>, window_params = [{transform_indices = @transform_0, window_bounds = array<i64: 8, 20>}, {pipeline_mode = #tpu.pipeline_mode<synchronous>, transform_indices = @transform_1, window_bounds = array<i64: 20, 256>}, {pipeline_mode = #tpu.pipeline_mode<synchronous>, transform_indices = @transform_2, window_bounds = array<i64: 1, 256>}, {pipeline_mode = #tpu.pipeline_mode<synchronous>, transform_indices = @transform_3, window_bounds = array<i64: 256, 128>}, {pipeline_mode = #tpu.pipeline_mode<synchronous>, transform_indices = @transform_4, window_bounds = array<i64: 1, 128>}, {pipeline_mode = #tpu.pipeline_mode<synchronous>, transform_indices = @transform_5, window_bounds = array<i64: 1, 128>}, {pipeline_mode = #tpu.pipeline_mode<synchronous>, transform_indices = @transform_6, window_bounds = array<i64: 1, 1>}, {transform_indices = @transform_7, window_bounds = array<i64: 8, 1>}]} {
    %c0 = arith.constant 0 : index
    %c0_0 = arith.constant 0 : index
    %0 = vector.load %arg1[%c0, %c0_0] : memref<8x20xf32, #tpu.memory_space<vmem>>, vector<8x20xf32>
    %c0_1 = arith.constant 0 : index
    %c0_2 = arith.constant 0 : index
    %1 = vector.load %arg2[%c0_1, %c0_2] : memref<20x256xf32, #tpu.memory_space<vmem>>, vector<20x256xf32>
    %cst = arith.constant dense<0.000000e+00> : vector<8x256xf32>
    %2 = tpu.matmul %0, %1, %cst {dimension_numbers = #tpu.dot_dimension_numbers<[1], [0], [0], [1], [0, 0, 1, 1], [], []>} : vector<8x20xf32>, vector<20x256xf32>, vector<8x256xf32> -> vector<8x256xf32>
    %c0_3 = arith.constant 0 : index
    %c0_4 = arith.constant 0 : index
    %3 = vector.load %arg3[%c0_3, %c0_4] : memref<1x256xf32, #tpu.memory_space<vmem>>, vector<1x256xf32>
    %4 = vector.broadcast %3 : vector<1x256xf32> to vector<8x256xf32>
    %5 = arith.addf %2, %4 : vector<8x256xf32>
    %cst_5 = arith.constant 0.000000e+00 : f32
    %6 = vector.broadcast %cst_5 : f32 to vector<8x256xf32>
    %7 = arith.maximumf %5, %6 : vector<8x256xf32>
    %c0_6 = arith.constant 0 : index
    %c0_7 = arith.constant 0 : index
    %8 = vector.load %arg4[%c0_6, %c0_7] : memref<256x128xf32, #tpu.memory_space<vmem>>, vector<256x128xf32>
    %cst_8 = arith.constant dense<0.000000e+00> : vector<8x128xf32>
    %9 = tpu.matmul %7, %8, %cst_8 {dimension_numbers = #tpu.dot_dimension_numbers<[1], [0], [0], [1], [0, 0, 1, 1], [], []>} : vector<8x256xf32>, vector<256x128xf32>, vector<8x128xf32> -> vector<8x128xf32>
    %c0_9 = arith.constant 0 : index
    %c0_10 = arith.constant 0 : index
    %10 = vector.load %arg5[%c0_9, %c0_10] : memref<1x128xf32, #tpu.memory_space<vmem>>, vector<1x128xf32>
    %11 = vector.broadcast %10 : vector<1x128xf32> to vector<8x128xf32>
    %12 = arith.addf %9, %11 : vector<8x128xf32>
    %cst_11 = arith.constant 0.000000e+00 : f32
    %13 = vector.broadcast %cst_11 : f32 to vector<8x128xf32>
    %14 = arith.maximumf %12, %13 : vector<8x128xf32>
    %c0_12 = arith.constant 0 : index
    %c0_13 = arith.constant 0 : index
    %15 = vector.load %arg6[%c0_12, %c0_13] : memref<1x128xf32, #tpu.memory_space<vmem>>, vector<1x128xf32>
    %16 = vector.broadcast %15 : vector<1x128xf32> to vector<8x128xf32>
    %17 = arith.mulf %14, %16 : vector<8x128xf32>
    %cst_14 = arith.constant dense<0.000000e+00> : vector<8xf32>
    %18 = vector.multi_reduction <add>, %17, %cst_14 [1] : vector<8x128xf32> to vector<8xf32>
    %19 = vector.shape_cast %18 : vector<8xf32> to vector<8x1xf32>
    %c0_15 = arith.constant 0 : index
    %c0_16 = arith.constant 0 : index
    %20 = vector.load %arg7[%c0_15, %c0_16] : memref<1x1xf32, #tpu.memory_space<vmem>>, vector<1x1xf32>
    %21 = vector.broadcast %20 : vector<1x1xf32> to vector<8x1xf32>
    %22 = arith.addf %19, %21 : vector<8x1xf32>
    %c0_17 = arith.constant 0 : index
    %c0_18 = arith.constant 0 : index
    %23 = vector.load %arg8[%c0_17, %c0_18] : memref<8x1xf32, #tpu.memory_space<vmem>>, vector<8x1xf32>
    tpu.vector_store %arg8[%c0_17, %c0_18], %22 {strides = array<i32>} : memref<8x1xf32, #tpu.memory_space<vmem>>, vector<8x1xf32>,
    return
  }
  func.func @transform_0(%arg0: i32) -> (i32, i32) {
    %c0_i32 = arith.constant 0 : i32
    %c0_i32_0 = arith.constant 0 : i32
    return %arg0, %c0_i32 : i32, i32
  }
  func.func @transform_1(%arg0: i32) -> (i32, i32) {
    %c0_i32 = arith.constant 0 : i32
    %c0_i32_0 = arith.constant 0 : i32
    %c0_i32_1 = arith.constant 0 : i32
    return %c0_i32, %c0_i32_0 : i32, i32
  }
  func.func @transform_2(%arg0: i32) -> (i32, i32) {
    %c0_i32 = arith.constant 0 : i32
    %c0_i32_0 = arith.constant 0 : i32
    %c0_i32_1 = arith.constant 0 : i32
    return %c0_i32, %c0_i32_0 : i32, i32
  }
  func.func @transform_3(%arg0: i32) -> (i32, i32) {
    %c0_i32 = arith.constant 0 : i32
    %c0_i32_0 = arith.constant 0 : i32
    %c0_i32_1 = arith.constant 0 : i32
    return %c0_i32, %c0_i32_0 : i32, i32
  }
  func.func @transform_4(%arg0: i32) -> (i32, i32) {
    %c0_i32 = arith.constant 0 : i32
    %c0_i32_0 = arith.constant 0 : i32
    %c0_i32_1 = arith.constant 0 : i32
    return %c0_i32, %c0_i32_0 : i32, i32
  }
  func.func @transform_5(%arg0: i32) -> (i32, i32) {
    %c0_i32 = arith.constant 0 : i32
    %c0_i32_0 = arith.constant 0 : i32
    %c0_i32_1 = arith.constant 0 : i32
    return %c0_i32, %c0_i32_0 : i32, i32
  }
  func.func @transform_6(%arg0: i32) -> (i32, i32) {
    %c0_i32 = arith.constant 0 : i32
    %c0_i32_0 = arith.constant 0 : i32
    %c0_i32_1 = arith.constant 0 : i32
    return %c0_i32, %c0_i32_0 : i32, i32
  }
  func.func @transform_7(%arg0: i32) -> (i32, i32) {
    %c0_i32 = arith.constant 0 : i32
    %c0_i32_0 = arith.constant 0 : i32
    return %arg0, %c0_i32 : i32, i32
  }
}

</mosaic_0001>

<llo_original>
// kernel: _critic_mlp.1
$region0: #{_critic_mlp.1}
  #allocation0 [shape = 'u32[]', space=smem, size = 0x4, offset = 0x4, fixed_abs, tag = 'smem constant byte address 0x4 - core index']
  #allocation1 [shape = 'u32[72,128]{1,0:T(1,128)}', space=vmem, size = 0x9000, scoped, tag = 'internal scratch']
  #allocation2 [shape = 'f32[1,1]{1,0:T(1,128)S(1)}', space=vmem, size = 0x200, scoped, tag = 'scoped memory for _critic_mlp.1']
  %s0 = inlined_call_operand.vmem [shape: f32[8,20], index: 0, kind: input, shape index: {}]
  %s1 = inlined_call_operand.hbm [shape: f32[20,256], index: 1, kind: input, shape index: {}]
  %s2 = inlined_call_operand.vmem [shape: f32[1,256], index: 2, kind: input, shape index: {}]
  %s3 = inlined_call_operand.hbm [shape: f32[256,128], index: 3, kind: input, shape index: {}]
  %s4 = inlined_call_operand.vmem [shape: f32[1,128], index: 4, kind: input, shape index: {}]
  %s5 = inlined_call_operand.vmem [shape: f32[1,128], index: 5, kind: input, shape index: {}]
  %s6 = inlined_call_operand.<no memory space> [shape: f32[1,1], index: 6, kind: input, shape index: {}]
  %s7 = inlined_call_operand.vmem [shape: f32[8,1], index: 7, kind: output, shape index: {}]
  %s8 = sld [smem:[#allocation0]]
  $region46: #{_critic_mlp.1} parent=0
    _
  %s10 = ssub.s32 1, %s8
  %s11 = scalar_select 0, %s10, %s8
  %v12 = vstv %s6
  %13 = vst [vmem:[#allocation2] sm:$0x1] %v12
  $region1: #{_critic_mlp.1} parent=0
    #allocation3 [shape = 'u8[24576]{0}', space=vmem, size = 0x6000, scoped, tag = 'input window, operand 1, single buffered']
    #allocation4 [shape = 's32[1]{0}', space=sflag, size = 0x4, scoped, tag = 'scoped memory for _critic_mlp.1']
    #allocation5 [shape = 'u8[131072]{0}', space=vmem, size = 0x20000, scoped, tag = 'input window, operand 3, single buffered']
    #allocation6 [shape = 's32[1]{0}', space=sflag, size = 0x4, scoped, tag = 'scoped memory for _critic_mlp.1']
    %14 = vsyncpa [#allocation4], 0
    %15 = vsyncpa [#allocation6], 0
    // Predicated region
    $region2: #{_critic_mlp.1} parent=1 // pred_check
      _
    $region3: #{_critic_mlp.1} parent=1 // pred_check_branch
      %17 = sbr.rel (0) target = $region5
    $region4: #{_critic_mlp.1} parent=1 // pred_region
      _
    $region5: #{_critic_mlp.1} parent=1 // pred_fallthru
      _
    // Predicated region
    $region6: #{_critic_mlp.1} parent=1 // pred_check
      _
    $region7: #{_critic_mlp.1} parent=1 // pred_check_branch
      %19 = sbr.rel (0) target = $region9
    $region8: #{_critic_mlp.1} parent=1 // pred_region
      %21 = vsyncadd [#allocation4], 0
      %s22 = sshll.u32 %s1, 4
      %s23 = int_to_ptr.hbm [resolvable:$true] %s22
      %s24 = sshll.u32 [#allocation3], 4
      %s25 = int_to_ptr.vmem [resolvable:$true] %s24
      %30 = dma.hbm_to_vmem [thread:$0]  %s23, 768, %s25, [#allocation4], 256, 256, 16
    $region9: #{_critic_mlp.1} parent=1 // pred_fallthru
      _
    // Predicated region
    $region10: #{_critic_mlp.1} parent=1 // pred_check
      _
    $region11: #{_critic_mlp.1} parent=1 // pred_check_branch
      %32 = sbr.rel (0) target = $region13
    $region12: #{_critic_mlp.1} parent=1 // pred_region
      _
    $region13: #{_critic_mlp.1} parent=1 // pred_fallthru
      _
    // Predicated region
    $region14: #{_critic_mlp.1} parent=1 // pred_check
      _
    $region15: #{_critic_mlp.1} parent=1 // pred_check_branch
      %34 = sbr.rel (0) target = $region17
    $region16: #{_critic_mlp.1} parent=1 // pred_region
      %36 = vsyncadd [#allocation6], 0
      %s37 = sshll.u32 %s3, 4
      %s38 = int_to_ptr.hbm [resolvable:$true] %s37
      %s39 = sshll.u32 [#allocation5], 4
      %s40 = int_to_ptr.vmem [resolvable:$true] %s39
      %45 = dma.hbm_to_vmem [thread:$0]  %s38, 4096, %s40, [#allocation6], 128, 128, 8
    $region17: #{_critic_mlp.1} parent=1 // pred_fallthru
      _
    // Predicated region
    $region18: #{_critic_mlp.1} parent=1 // pred_check
      _
    $region19: #{_critic_mlp.1} parent=1 // pred_check_branch
      %47 = sbr.rel (0) target = $region21
    $region20: #{_critic_mlp.1} parent=1 // pred_region
      _
    $region21: #{_critic_mlp.1} parent=1 // pred_fallthru
      _
    // Predicated region
    $region22: #{_critic_mlp.1} parent=1 // pred_check
      _
    $region23: #{_critic_mlp.1} parent=1 // pred_check_branch
      %49 = sbr.rel (0) target = $region25
    $region24: #{_critic_mlp.1} parent=1 // pred_region
      _
    $region25: #{_critic_mlp.1} parent=1 // pred_fallthru
      _
    // Predicated region
    $region26: #{_critic_mlp.1} parent=1 // pred_check
      _
    $region27: #{_critic_mlp.1} parent=1 // pred_check_branch
      %51 = sbr.rel (0) target = $region29
    $region28: #{_critic_mlp.1} parent=1 // pred_region
      _
    $region29: #{_critic_mlp.1} parent=1 // pred_fallthru
      _
    // Predicated region
    $region30: #{_critic_mlp.1} parent=1 // pred_check
      _
    $region31: #{_critic_mlp.1} parent=1 // pred_check_branch
      %53 = sbr.rel (0) target = $region33
    $region32: #{_critic_mlp.1} parent=1 // pred_region
      %55 = dma.done [#allocation4], 768
    $region33: #{_critic_mlp.1} parent=1 // pred_fallthru
      _
    // Predicated region
    $region34: #{_critic_mlp.1} parent=1 // pred_check
      _
    $region35: #{_critic_mlp.1} parent=1 // pred_check_branch
      %57 = sbr.rel (0) target = $region37
    $region36: #{_critic_mlp.1} parent=1 // pred_region
      %59 = dma.done [#allocation6], 4096
    $region37: #{_critic_mlp.1} parent=1 // pred_fallthru
      _
    %v60 = vld [vmem:[%s0] sm:$0xff]
    %v61 = vld [vmem:[#allocation3] sm:$0xff]
    %v62 = vld [vmem:[#allocation3 + $0x8] sm:$0xff]
    %v63 = vld [vmem:[#allocation3 + $0x10] sm:$0xff]
    %v64 = vld [vmem:[#allocation3 + $0x18] sm:$0xff]
    %v65 = vld [vmem:[#allocation3 + $0x20] sm:$0xf]
    %v66 = vld [vmem:[#allocation3 + $0x28] sm:$0xf]
    %v67 = vld [vmem:[%s2] sm:$0x3]
    %v69 = vperm.slane %v67, 0
    %v70 = vperm.slane %v67, 1
    %vm73 = vcmask 162816
    %v75 = vsel %vm73, %v60, 0
    %vm77 = vcmask 1043456
    %v79 = vsel %vm77, %v65, 0
    %v82 = vsel %vm77, %v66, 0
    %84 = vmatpush.msra.mxu0 0.0
    %85 = vmatpush.msra.mxu0 0.0
    %86 = vmatpush.msra.mxu0 0.0
    %87 = vmatpush.msra.mxu0 0.0
    %88 = vmatpush.msra.mxu0 0.0
    %89 = vmatpush.msra.mxu0 0.0
    %90 = vmatpush.msra.mxu0 0.0
    %91 = vmatpush.msra.mxu0 0.0
    %92 = vmatpush.msra.mxu0 0.0
    %93 = vmatpush.msra.mxu0 0.0
    %94 = vmatpush.msra.mxu0 0.0
    %95 = vmatpush.msra.mxu0 0.0
    %96 = vmatpush.msra.mxu0 0.0
    %97 = vmatpush.msra.mxu0 %v79
    %98 = vmatpush.msra.mxu0 %v63
    %99 = vmatpush.msra.mxu0 %v61
    %100 = vmatmul.f32.gmra.mxu0 %v75
    %v101 = vpop.f32.mrf.mxu0
    %v102 = vadd.f32 %v69, %v101
    %103 = vdwg.mxu0
    %104 = vmatpush.msra.mxu0 0.0
    %105 = vmatpush.msra.mxu0 0.0
    %106 = vmatpush.msra.mxu0 0.0
    %107 = vmatpush.msra.mxu0 0.0
    %108 = vmatpush.msra.mxu0 0.0
    %109 = vmatpush.msra.mxu0 0.0
    %110 = vmatpush.msra.mxu0 0.0
    %111 = vmatpush.msra.mxu0 0.0
    %112 = vmatpush.msra.mxu0 0.0
    %113 = vmatpush.msra.mxu0 0.0
    %114 = vmatpush.msra.mxu0 0.0
    %115 = vmatpush.msra.mxu0 0.0
    %116 = vmatpush.msra.mxu0 0.0
    %117 = vmatpush.msra.mxu0 %v82
    %118 = vmatpush.msra.mxu0 %v64
    %119 = vmatpush.msra.mxu0 %v62
    %120 = vmatmul.f32.gmra.mxu0 %v75
    %v121 = vpop.f32.mrf.mxu0
    %v122 = vadd.f32 %v70, %v121
    %123 = vdwg.mxu0
    %v124 = vmax.f32 %v102, 0.0
    %v125 = vmax.f32 %v122, 0.0
    %v126 = vld [vmem:[#allocation5] sm:$0xff]
    %v127 = vld [vmem:[#allocation5 + $0x8] sm:$0xff]
    %v128 = vld [vmem:[#allocation5 + $0x10] sm:$0xff]
    %v129 = vld [vmem:[#allocation5 + $0x18] sm:$0xff]
    %v130 = vld [vmem:[#allocation5 + $0x20] sm:$0xff]
    %v131 = vld [vmem:[#allocation5 + $0x28] sm:$0xff]
    %v132 = vld [vmem:[#allocation5 + $0x30] sm:$0xff]
    %v133 = vld [vmem:[#allocation5 + $0x38] sm:$0xff]
    %v134 = vld [vmem:[#allocation5 + $0x40] sm:$0xff]
    %v135 = vld [vmem:[#allocation5 + $0x48] sm:$0xff]
    %v136 = vld [vmem:[#allocation5 + $0x50] sm:$0xff]
    %v137 = vld [vmem:[#allocation5 + $0x58] sm:$0xff]
    %v138 = vld [vmem:[#allocation5 + $0x60] sm:$0xff]
    %v139 = vld [vmem:[#allocation5 + $0x68] sm:$0xff]
    %v140 = vld [vmem:[#allocation5 + $0x70] sm:$0xff]
    %v141 = vld [vmem:[#allocation5 + $0x78] sm:$0xff]
    %v142 = vld [vmem:[#allocation5 + $0x80] sm:$0xff]
    %v143 = vld [vmem:[#allocation5 + $0x88] sm:$0xff]
    %v144 = vld [vmem:[#allocation5 + $0x90] sm:$0xff]
    %v145 = vld [vmem:[#allocation5 + $0x98] sm:$0xff]
    %v146 = vld [vmem:[#allocation5 + $0xa0] sm:$0xff]
    %v147 = vld [vmem:[#allocation5 + $0xa8] sm:$0xff]
    %v148 = vld [vmem:[#allocation5 + $0xb0] sm:$0xff]
    %v149 = vld [vmem:[#allocation5 + $0xb8] sm:$0xff]
    %v150 = vld [vmem:[#allocation5 + $0xc0] sm:$0xff]
    %v151 = vld [vmem:[#allocation5 + $0xc8] sm:$0xff]
    %v152 = vld [vmem:[#allocation5 + $0xd0] sm:$0xff]
    %v153 = vld [vmem:[#allocation5 + $0xd8] sm:$0xff]
    %v154 = vld [vmem:[#allocation5 + $0xe0] sm:$0xff]
    %v155 = vld [vmem:[#allocation5 + $0xe8] sm:$0xff]
    %v156 = vld [vmem:[#allocation5 + $0xf0] sm:$0xff]
    %v157 = vld [vmem:[#allocation5 + $0xf8] sm:$0xff]
    %v158 = vld [vmem:[%s4] sm:$0x1]
    %v160 = vperm.slane %v158, 0
    %162 = vmatpush.msra.mxu0 %v141
    %163 = vmatpush.msra.mxu0 %v140
    %164 = vmatpush.msra.mxu0 %v139
    %165 = vmatpush.msra.mxu0 %v138
    %166 = vmatpush.msra.mxu0 %v137
    %167 = vmatpush.msra.mxu0 %v136
    %168 = vmatpush.msra.mxu0 %v135
    %169 = vmatpush.msra.mxu0 %v134
    %170 = vmatpush.msra.mxu0 %v133
    %171 = vmatpush.msra.mxu0 %v132
    %172 = vmatpush.msra.mxu0 %v131
    %173 = vmatpush.msra.mxu0 %v130
    %174 = vmatpush.msra.mxu0 %v129
    %175 = vmatpush.msra.mxu0 %v128
    %176 = vmatpush.msra.mxu0 %v127
    %177 = vmatpush.msra.mxu0 %v126
    %178 = vmatmul.f32.gmra.mxu0 %v124
    %v179 = vpop.f32.mrf.mxu0
    %v180 = vadd.f32 %v160, %v179
    %181 = vdwg.mxu0
    %182 = vmatpush.msra.mxu0 %v157
    %183 = vmatpush.msra.mxu0 %v156
    %184 = vmatpush.msra.mxu0 %v155
    %185 = vmatpush.msra.mxu0 %v154
    %186 = vmatpush.msra.mxu0 %v153
    %187 = vmatpush.msra.mxu0 %v152
    %188 = vmatpush.msra.mxu0 %v151
    %189 = vmatpush.msra.mxu0 %v150
    %190 = vmatpush.msra.mxu0 %v149
    %191 = vmatpush.msra.mxu0 %v148
    %192 = vmatpush.msra.mxu0 %v147
    %193 = vmatpush.msra.mxu0 %v146
    %194 = vmatpush.msra.mxu0 %v145
    %195 = vmatpush.msra.mxu0 %v144
    %196 = vmatpush.msra.mxu0 %v143
    %197 = vmatpush.msra.mxu0 %v142
    %198 = vmatmul.f32.gmra.mxu0 %v125
    %v199 = vpop.f32.mrf.mxu0
    %v200 = vadd.f32 %v180, %v199
    %201 = vdwg.mxu0
    %v202 = vmax.f32 %v200, 0.0
    %v203 = vld [vmem:[%s5] sm:$0x1]
    %v205 = vperm.slane %v203, 0
    %v207 = vmul.f32 %v202, %v205
    %208 = vadd.xlane.f32.xlu0 %v207
    %v209 = vpop.xlane.xlu0 %208
    %v210 = vld [vmem:[#allocation2] sm:$0x1]
    %v212 = vperm.slane %v210, 0
    %v214 = vadd.f32 %v209, %v212
    %vm215 = vcmask 7168
    %216 = vst.msk [vmem:[%s7] sm:$0xff] %vm215, %v214
    // Predicated region
    $region38: #{_critic_mlp.1} parent=1 // pred_check
      _
    $region39: #{_critic_mlp.1} parent=1 // pred_check_branch
      %218 = sbr.rel (0) target = $region41
    $region40: #{_critic_mlp.1} parent=1 // pred_region
      _
    $region41: #{_critic_mlp.1} parent=1 // pred_fallthru
      _
    // Predicated region
    $region42: #{_critic_mlp.1} parent=1 // pred_check
      _
    $region43: #{_critic_mlp.1} parent=1 // pred_check_branch
      %220 = sbr.rel (0) target = $region45
    $region44: #{_critic_mlp.1} parent=1 // pred_region
      _
    $region45: #{_critic_mlp.1} parent=1 // pred_fallthru
      _
    %221 = vsyncpa [#allocation4], 1
    %222 = vsyncpa [#allocation6], 1

</llo_original>
